<compile_context>
chip_gen: v6e
topology: v6e:2x2x1
jax: 0.10.0
libtpu: 0.0.40
codegen_flags: <defaults>
</compile_context>

<pallas_src>
import jax
import jax.numpy as jnp
from jax.experimental import pallas as pl
from jax.experimental.pallas import tpu as pltpu


_LANE = 512              # lane (last-dim) width of the slab: multiple of 128
_SUBLANE = 8             # f32 sublane granularity
_MAX_BLOCK_ROWS = 1024   # (1024, 512) f32 = 2 MiB/block; ~8 MiB double-buffered
_MIN_GRID_BLOCKS = 4     # >= 2 blocks per TensorCore on v7x megacore
_MIN_PALLAS_ELEMS = 32768  # below this, plain-XLA Horner wins (overhead-bound)
_VMEM_LIMIT_BYTES = 32 * 1024 * 1024  # safe on v5e/v6e (128 MiB) and v7x (64 MiB)


def _round_up(a: int, m: int) -> int:
    return ((a + m - 1) // m) * m


def _horner_jnp(weights: jax.Array, x_flat: jax.Array) -> jax.Array:
    """Plain-XLA Horner evaluation (small-N fast path / reference building block)."""
    d_plus_1 = int(weights.shape[0])
    acc = jnp.full_like(x_flat, weights[d_plus_1 - 1])
    for i in range(d_plus_1 - 2, -1, -1):
        acc = acc * x_flat + weights[i]
    return acc


def _make_horner_kernel(d_plus_1: int):
    """Kernel computing sum_i w[i] * x**i (Horner form) over the current 2-D tile."""

    def kernel(w_ref, x_ref, o_ref):
        # w_ref: (d+1,) f32, scalar-prefetched into SMEM.  Hoist all scalar
        # reads out of the vector expression (one SMEM load each; avoids
        # repeated broadcast_in_dim of the coefficients inside the loop).
        ws = [w_ref[i] for i in range(d_plus_1)]
        x = x_ref[...]                                  # (block_r, _LANE) f32
        acc = jnp.full_like(x, ws[d_plus_1 - 1])
        # Horner: acc = acc * x + w[i]  (1 mul + 1 add per degree on the VPU)
        for i in range(d_plus_1 - 2, -1, -1):
            acc = acc * x + ws[i]
        o_ref[...] = acc

    return kernel


def perceptron2classes_forward(
    weights: jax.Array, x: jax.Array, *, min_pallas_elems: int = _MIN_PALLAS_ELEMS
) -> jax.Array:
    """weights: (d+1,) float32 ; x: (1, N) float32 -> (1, N) float32."""
    d_plus_1 = int(weights.shape[0])
    _, n = x.shape
    x_flat = x.reshape(-1)

    # Small-N fast path: the fixed pallas_call overhead + slab padding would
    # dominate; a fused XLA elementwise chain is as fast or faster.
    if n < min_pallas_elems:
        return _horner_jnp(weights, x_flat).reshape(1, n)

    # Re-present (1, N) as a sublane/lane-dense 2-D slab (rows, _LANE).
    # Pad only to the next lane multiple (<= 511 elements); the grid handles
    # ragged row counts via pl.cdiv + masked last block.
    n_pad = _round_up(n, _LANE)
    if n_pad != n:
        x_flat = jnp.pad(x_flat, (0, n_pad - n))
    rows = n_pad // _LANE
    x2d = x_flat.reshape(rows, _LANE)

    # Block rows: multiple of 8 (f32 sublane), capped at _MAX_BLOCK_ROWS, and
    # small enough that the grid has >= _MIN_GRID_BLOCKS blocks (v7x megacore).
    if rows <= _SUBLANE:
        block_r = rows
    else:
        block_r = min(
            _MAX_BLOCK_ROWS,
            max(_SUBLANE, _round_up(pl.cdiv(rows, _MIN_GRID_BLOCKS), _SUBLANE)),
        )
    grid = pl.cdiv(rows, block_r)

    kernel = _make_horner_kernel(d_plus_1)
    d = d_plus_1 - 1
    cost = pl.CostEstimate(
        flops=2 * d * n_pad,                       # Horner: d mul + d add per element
        transcendentals=0,
        bytes_accessed=2 * 4 * n_pad + 4 * d_plus_1,  # read x + write out + weights
    )

    out2d = pl.pallas_call(
        kernel,
        out_shape=jax.ShapeDtypeStruct((rows, _LANE), jnp.float32),
        grid_spec=pltpu.PrefetchScalarGridSpec(
            num_scalar_prefetch=1,                 # weights -> SMEM before the grid runs
            grid=(grid,),
            in_specs=[
                pl.BlockSpec((block_r, _LANE), lambda i, w: (i, 0)),  # x slab tile
            ],
            out_specs=pl.BlockSpec((block_r, _LANE), lambda i, w: (i, 0)),
        ),
        compiler_params=pltpu.CompilerParams(
            dimension_semantics=("parallel",),     # independent tiles -> both TCs on v7x
            vmem_limit_bytes=_VMEM_LIMIT_BYTES,
        ),
        cost_estimate=cost,
    )(weights, x2d)

    # Back to the (1, N) API-boundary view (free reshape when n == n_pad).
    return out2d.reshape(-1)[:n].reshape(1, n)


def _reference(weights: jax.Array, x: jax.Array) -> jax.Array:
    """Pure-JAX power-basis reference: out[0, j] = sum_i w_i * x[0, j]**i."""
    d_plus_1 = int(weights.shape[0])
    powers = jnp.stack([x[0] ** i for i in range(d_plus_1)], axis=0)  # (d+1, N)
    return weights[None, :] @ powers                                  # (1, N)


if __name__ == "__main__":
    # Module config: Perceptron2Classes(d=4) -> d+1 = 5 scalar parameters.
    d = 4
    d_plus_1 = d + 1

    key = jax.random.PRNGKey(0)
    k_w, k_a, k_b, k_c = jax.random.split(key, 4)

    # Deterministic parameter init (stand-in for torch.randn(1) per parameter).
    weights = jax.random.normal(k_w, (d_plus_1,), dtype=jnp.float32)

    # Case A: tiny N -> plain-XLA fast path.
    x_small = jax.random.normal(k_a, (1, 256), dtype=jnp.float32)
    out_small = jax.block_until_ready(perceptron2classes_forward(weights, x_small))
    ref_small = _reference(weights, x_small)
    assert out_small.shape == x_small.shape and out_small.dtype == jnp.float32
    assert jnp.allclose(out_small, ref_small, rtol=1e-5, atol=1e-4)

    # Case B: ragged N (5000 -> padded to 5120, rows=10, ragged last block),
    # forced through the Pallas kernel.
    x_rag = jax.random.normal(k_b, (1, 5000), dtype=jnp.float32)
    out_rag = jax.block_until_ready(
        perceptron2classes_forward(weights, x_rag, min_pallas_elems=0)
    )
    ref_rag = _reference(weights, x_rag)
    assert out_rag.shape == x_rag.shape and out_rag.dtype == jnp.float32
    assert jnp.allclose(out_rag, ref_rag, rtol=1e-5, atol=1e-4)

    # Case C: lane-aligned N (no padding, no output copy), Pallas path, grid > 1.
    x_al = jax.random.normal(k_c, (1, 8192), dtype=jnp.float32)
    out_al = jax.block_until_ready(
        perceptron2classes_forward(weights, x_al, min_pallas_elems=0)
    )
    ref_al = _reference(weights, x_al)
    assert out_al.shape == x_al.shape and out_al.dtype == jnp.float32
    assert jnp.allclose(out_al, ref_al, rtol=1e-5, atol=1e-4)

    print("KERNEL_OK")
</pallas_src>

<mosaic_0001>
module attributes {stable_mosaic.version = 11 : i64} {
  func.func @kernel(%arg0: i32, %arg1: memref<5xf32, #tpu.memory_space<smem>>, %arg2: memref<8x512xf32, #tpu.memory_space<vmem>>, %arg3: memref<8x512xf32, #tpu.memory_space<vmem>>) attributes {dimension_semantics = [#tpu.dimension_semantics<parallel>], iteration_bounds = array<i64: 2>, scalar_prefetch = 1 : i64, scratch_operands = 0 : i64, tpu.core_type = #tpu.core_type<tc>, window_params = [{transform_indices = @transform_0, window_bounds = array<i64: 8, 512>}, {transform_indices = @transform_1, window_bounds = array<i64: 8, 512>}]} {
    %c0 = arith.constant 0 : index
    %0 = memref.load %arg1[%c0] : memref<5xf32, #tpu.memory_space<smem>>
    %c1 = arith.constant 1 : index
    %1 = memref.load %arg1[%c1] : memref<5xf32, #tpu.memory_space<smem>>
    %c2 = arith.constant 2 : index
    %2 = memref.load %arg1[%c2] : memref<5xf32, #tpu.memory_space<smem>>
    %c3 = arith.constant 3 : index
    %3 = memref.load %arg1[%c3] : memref<5xf32, #tpu.memory_space<smem>>
    %c4 = arith.constant 4 : index
    %4 = memref.load %arg1[%c4] : memref<5xf32, #tpu.memory_space<smem>>
    %c0_0 = arith.constant 0 : index
    %c0_1 = arith.constant 0 : index
    %5 = vector.load %arg2[%c0_0, %c0_1] : memref<8x512xf32, #tpu.memory_space<vmem>>, vector<8x512xf32>
    %6 = vector.broadcast %4 : f32 to vector<8x512xf32>
    %7 = arith.mulf %6, %5 : vector<8x512xf32>
    %8 = vector.broadcast %3 : f32 to vector<8x512xf32>
    %9 = arith.addf %7, %8 : vector<8x512xf32>
    %10 = arith.mulf %9, %5 : vector<8x512xf32>
    %11 = vector.broadcast %2 : f32 to vector<8x512xf32>
    %12 = arith.addf %10, %11 : vector<8x512xf32>
    %13 = arith.mulf %12, %5 : vector<8x512xf32>
    %14 = vector.broadcast %1 : f32 to vector<8x512xf32>
    %15 = arith.addf %13, %14 : vector<8x512xf32>
    %16 = arith.mulf %15, %5 : vector<8x512xf32>
    %17 = vector.broadcast %0 : f32 to vector<8x512xf32>
    %18 = arith.addf %16, %17 : vector<8x512xf32>
    %c0_2 = arith.constant 0 : index
    %c0_3 = arith.constant 0 : index
    %19 = vector.load %arg3[%c0_2, %c0_3] : memref<8x512xf32, #tpu.memory_space<vmem>>, vector<8x512xf32>
    tpu.vector_store %arg3[%c0_2, %c0_3], %18 {strides = array<i32>} : memref<8x512xf32, #tpu.memory_space<vmem>>, vector<8x512xf32>,
    return
  }
  func.func @transform_0(%arg0: i32, %arg1: memref<5xf32, #tpu.memory_space<smem>>) -> (i32, i32) {
    %c0_i32 = arith.constant 0 : i32
    %c0_i32_0 = arith.constant 0 : i32
    return %arg0, %c0_i32 : i32, i32
  }
  func.func @transform_1(%arg0: i32, %arg1: memref<5xf32, #tpu.memory_space<smem>>) -> (i32, i32) {
    %c0_i32 = arith.constant 0 : i32
    %c0_i32_0 = arith.constant 0 : i32
    return %arg0, %c0_i32 : i32, i32
  }
}

</mosaic_0001>

<llo_original>
// kernel: tpu_custom_call.1
$region0: #{tpu_custom_call.1}
  #allocation0 [shape = 'u32[]', space=smem, size = 0x4, offset = 0x4, fixed_abs, tag = 'smem constant byte address 0x4 - core index']
  #allocation1 [shape = 'u32[144,128]{1,0:T(1,128)}', space=vmem, size = 0x12000, scoped, tag = 'internal scratch']
  #allocation2 [shape = 's32[1]{0}', space=sflag, size = 0x4, scoped, tag = 'scoped memory for tpu_custom_call.1']
  #allocation3 [shape = 'u8[512]{0}', space=smem, size = 0x200, scoped, tag = 'prefetched SMEM operand 0']
  %s0 = inlined_call_operand.hbm [shape: f32[5], index: 0, kind: input, shape index: {}]
  %s1 = inlined_call_operand.hbm [shape: f32[10,512], index: 1, kind: input, shape index: {}]
  %s2 = inlined_call_operand.hbm [shape: f32[10,512], index: 2, kind: output, shape index: {}]
  %s3 = sld [smem:[#allocation0]]
  $region41: #{tpu_custom_call.1} parent=0
    _
  %s5 = ssub.s32 1, %s3
  %s6 = scalar_select 0, %s5, %s3
  %8 = dma.hbm_to_smem %s0, 16, [#allocation3], [#allocation2]
  %9 = dma.done [#allocation2], 16
  %10 = sfence
  $region1: #{tpu_custom_call.1} parent=0
    #allocation4 [shape = 'u8[32768]{0}', space=vmem, size = 0x8000, scoped, tag = 'input window, operand 1']
    #allocation5 [shape = 's32[2]{0}', space=sflag, size = 0x8, scoped, tag = 'scoped memory for tpu_custom_call.1']
    #allocation6 [shape = 's32[2]{0}', space=sflag, size = 0x8, scoped, tag = 'scoped memory for tpu_custom_call.1']
    #allocation7 [shape = 'u8[32768]{0}', space=vmem, size = 0x8000, scoped, tag = 'output window, operand 0']
    %11 = vsyncpa [#allocation5], 0
    %s12 = scalar_lea.sflag [#allocation5], 1
    %13 = vsyncpa %s12, 0
    %14 = vsyncpa [#allocation6], 0
    %s15 = scalar_lea.sflag [#allocation6], 1
    %16 = vsyncpa %s15, 0
    loop: start=0, step=1, limit=4
    $region2: #{tpu_custom_call.1} parent=1 // loop_pre_header
      _
    $region3: #{tpu_custom_call.1} parent=1 // loop_header
      %s18 = sphi 0, %s22
      %p19 = scmp.ge.s32.totalorder %s18, 4
      %s28 = sphi 0, %s30
      %s31 = sphi 0, %s28
      %s32 = sphi 0, %s31
      %s48 = sphi 0, %s32
      %s54 = sphi 0, %s56
      %s57 = sphi 0, %s54
      %s58 = sphi 0, %s57
      %s74 = sphi 0, %s58
    $region4: #{tpu_custom_call.1} parent=1 // loop_header_branch
      %21 = sbr.rel (%p19) target = $region8
    $region5: #{tpu_custom_call.1} parent=1 // loop_body
      %s23 = ssub.s32 %s18, 1
      %s24 = ssub.s32 %s18, 2
      %s25 = sadd.s32 %s18, 1
      %s26 = ssub.s32 %s18, %s25
      %p27 = scmp.eq.s32.totalorder %s26, 0
      %s29 = sadd.s32 %s28, 1
      %s30 = scalar_select %p27, %s28, %s29
      %p33 = pneg %p27
      %p34 = scmp.eq.s32.totalorder %s18, 1
      %p35 = por %p33, %p34
      %p36 = scmp.ne.s32.totalorder %s28, %s31
      %p37 = scmp.eq.s32.totalorder %s18, 0
      %p38 = por %p36, %p37
      %p39 = scmp.ne.s32.totalorder %s28, %s31
      %p40 = scmp.eq.s32.totalorder %s23, 1
      %p41 = por %p39, %p40
      %p42 = scmp.ne.s32.totalorder %s31, %s32
      %p43 = scmp.eq.s32.totalorder %s23, 0
      %p44 = por %p42, %p43
      %p45 = scmp.ne.s32.totalorder %s31, %s32
      %p46 = scmp.eq.s32.totalorder %s24, 1
      %p47 = por %p45, %p46
      %p49 = scmp.ne.s32.totalorder %s32, %s48
      %p50 = scmp.eq.s32.totalorder %s24, 0
      %p51 = por %p49, %p50
      %s52 = ssub.s32 %s18, %s25
      %p53 = scmp.eq.s32.totalorder %s52, 0
      %s55 = sadd.s32 %s54, 1
      %s56 = scalar_select %p53, %s54, %s55
      %p59 = pneg %p53
      %p60 = scmp.eq.s32.totalorder %s18, 1
      %p61 = por %p59, %p60
      %p62 = scmp.ne.s32.totalorder %s54, %s57
      %p63 = scmp.eq.s32.totalorder %s18, 0
      %p64 = por %p62, %p63
      %p65 = scmp.ne.s32.totalorder %s54, %s57
      %p66 = scmp.eq.s32.totalorder %s23, 1
      %p67 = por %p65, %p66
      %p68 = scmp.ne.s32.totalorder %s57, %s58
      %p69 = scmp.eq.s32.totalorder %s23, 0
      %p70 = por %p68, %p69
      %p71 = scmp.ne.s32.totalorder %s57, %s58
      %p72 = scmp.eq.s32.totalorder %s24, 1
      %p73 = por %p71, %p72
      %p75 = scmp.ne.s32.totalorder %s58, %s74
      %p76 = scmp.eq.s32.totalorder %s24, 0
      %p77 = por %p75, %p76
      %p78 = scmp.le.s32.totalorder 1, %s18
      %p79 = scmp.lt.s32.totalorder %s18, 3
      %p80 = pnand %p78, %p79
      %p81 = pneg %p80
      // Predicated region
      $region9: #{tpu_custom_call.1} parent=5 // pred_check
        _
      $region10: #{tpu_custom_call.1} parent=5 // pred_check_branch
        %83 = sbr.rel (%p80) target = $region12
      $region11: #{tpu_custom_call.1} parent=5 // pred_region
        %s84 = ssub.s32 %s18, 1
      $region12: #{tpu_custom_call.1} parent=5 // pred_fallthru
        _
      %p85 = scmp.lt.s32.totalorder %s18, 2
      // Predicated region
      $region13: #{tpu_custom_call.1} parent=5 // pred_check
        %p86 = pneg %p85
      $region14: #{tpu_custom_call.1} parent=5 // pred_check_branch
        %88 = sbr.rel (%p86) target = $region16
      $region15: #{tpu_custom_call.1} parent=5 // pred_region
        // Predicated region
        $region17: #{tpu_custom_call.1} parent=15 // pred_check
          %p89 = pneg %p38
        $region18: #{tpu_custom_call.1} parent=15 // pred_check_branch
          %91 = sbr.rel (%p89) target = $region20
        $region19: #{tpu_custom_call.1} parent=15 // pred_region
          %s92 = sand.u32 %s28, 1
          %s93 = scalar_lea.sflag [#allocation5], %s92
          %s94 = sand.u32 %s28, 1
          %s95 = smul.addr %s94, 32
          %s96 = scalar_lea.vmem [#allocation4], %s95
          %s98 = ssub.s32 512, 512
          %99 = vsyncadd %s93, %s98
          %s100 = smul.addr %s18, 4
          %s101 = smul.addr %s100, 128
          %s102 = scalar_lea.hbm %s1, %s101
          %s104 = sshll.u32 %s96, 4
          %s105 = int_to_ptr.vmem [resolvable:$true] %s104
          %107 = dma.hbm_to_vmem [thread:$0]  %s102, 512, %s105, %s93
        $region20: #{tpu_custom_call.1} parent=15 // pred_fallthru
          _
      $region16: #{tpu_custom_call.1} parent=5 // pred_fallthru
        _
      %p108 = scmp.le.s32.totalorder 1, %s18
      %p109 = scmp.lt.s32.totalorder %s18, 3
      %p110 = pnand %p108, %p109
      %p111 = pneg %p110
      // Predicated region
      $region21: #{tpu_custom_call.1} parent=5 // pred_check
        _
      $region22: #{tpu_custom_call.1} parent=5 // pred_check_branch
        %113 = sbr.rel (%p110) target = $region24
      $region23: #{tpu_custom_call.1} parent=5 // pred_region
        %s114 = ssub.s32 %s18, 1
        %s115 = sand.u32 %s31, 1
        %s116 = scalar_lea.sflag [#allocation5], %s115
        %s117 = sand.u32 %s31, 1
        %s118 = smul.addr %s117, 32
        %s119 = scalar_lea.vmem [#allocation4], %s118
        // Predicated region
        $region25: #{tpu_custom_call.1} parent=23 // pred_check
          %p120 = pneg %p44
        $region26: #{tpu_custom_call.1} parent=23 // pred_check_branch
          %122 = sbr.rel (%p120) target = $region28
        $region27: #{tpu_custom_call.1} parent=23 // pred_region
          %123 = dma.done %s116, 512
        $region28: #{tpu_custom_call.1} parent=23 // pred_fallthru
          _
        %s124 = sand.u32 %s31, 1
        %s125 = scalar_lea.sflag [#allocation5], %s124
        %s126 = sand.u32 %s31, 1
        %s127 = smul.addr %s126, 32
        %s128 = scalar_lea.vmem [#allocation4], %s127
        %p129 = pneg %p44
        %p130 = pneg %p41
        %p131 = pneg %p70
        %p132 = pneg %p67
        %s133 = sand.u32 %s57, 1
        %s134 = scalar_lea.sflag [#allocation6], %s133
        %s135 = sand.u32 %s57, 1
        %s136 = smul.addr %s135, 32
        %s137 = scalar_lea.vmem [#allocation7], %s136
        %s138 = sld [smem:[#allocation3]]
        %s139 = sld [smem:[#allocation3 + $0x1]]
        %s140 = sld [smem:[#allocation3 + $0x2]]
        %s141 = sld [smem:[#allocation3 + $0x3]]
        %s142 = sld [smem:[#allocation3 + $0x4]]
        %v143 = vld [vmem:[%s119] sm:$0xff]
        %v144 = vld [vmem:[%s119 + $0x8] sm:$0xff]
        %v145 = vld [vmem:[%s119 + $0x10] sm:$0xff]
        %v146 = vld [vmem:[%s119 + $0x18] sm:$0xff]
        %v147 = vstv %s142
        %v148 = vmul.f32 %v147, %v143
        %v149 = vmul.f32 %v147, %v144
        %v150 = vmul.f32 %v147, %v145
        %v151 = vmul.f32 %v147, %v146
        %v152 = vstv %s141
        %v153 = vadd.f32 %v148, %v152
        %v154 = vadd.f32 %v149, %v152
        %v155 = vadd.f32 %v150, %v152
        %v156 = vadd.f32 %v151, %v152
        %v157 = vmul.f32 %v153, %v143
        %v158 = vmul.f32 %v154, %v144
        %v159 = vmul.f32 %v155, %v145
        %v160 = vmul.f32 %v156, %v146
        %v161 = vstv %s140
        %v162 = vadd.f32 %v157, %v161
        %v163 = vadd.f32 %v158, %v161
        %v164 = vadd.f32 %v159, %v161
        %v165 = vadd.f32 %v160, %v161
        %v166 = vmul.f32 %v162, %v143
        %v167 = vmul.f32 %v163, %v144
        %v168 = vmul.f32 %v164, %v145
        %v169 = vmul.f32 %v165, %v146
        %v170 = vstv %s139
        %v171 = vadd.f32 %v166, %v170
        %v172 = vadd.f32 %v167, %v170
        %v173 = vadd.f32 %v168, %v170
        %v174 = vadd.f32 %v169, %v170
        %v175 = vmul.f32 %v171, %v143
        %v176 = vmul.f32 %v172, %v144
        %v177 = vmul.f32 %v173, %v145
        %v178 = vmul.f32 %v174, %v146
        %v179 = vstv %s138
        %v180 = vadd.f32 %v175, %v179
        %v181 = vadd.f32 %v176, %v179
        %v182 = vadd.f32 %v177, %v179
        %v183 = vadd.f32 %v178, %v179
        %184 = vst [vmem:[%s137] sm:$0xff] %v180
        %185 = vst [vmem:[%s137 + $0x8] sm:$0xff] %v181
        %186 = vst [vmem:[%s137 + $0x10] sm:$0xff] %v182
        %187 = vst [vmem:[%s137 + $0x18] sm:$0xff] %v183
        %s188 = sand.u32 %s57, 1
        %s189 = scalar_lea.sflag [#allocation6], %s188
        %s190 = sand.u32 %s57, 1
        %s191 = smul.addr %s190, 32
        %s192 = scalar_lea.vmem [#allocation7], %s191
        // Predicated region
        $region29: #{tpu_custom_call.1} parent=23 // pred_check
          %p193 = pneg %p67
        $region30: #{tpu_custom_call.1} parent=23 // pred_check_branch
          %195 = sbr.rel (%p193) target = $region32
        $region31: #{tpu_custom_call.1} parent=23 // pred_region
          %s197 = ssub.s32 512, 512
          %198 = vsyncadd %s189, %s197
          %s199 = smul.addr %s23, 4
          %s200 = smul.addr %s199, 128
          %s201 = scalar_lea.hbm %s2, %s200
          %s203 = sshll.u32 %s192, 4
          %s204 = int_to_ptr.vmem [resolvable:$true] %s203
          %206 = dma.vmem_to_hbm [thread:$0]  %s204, 512, %s201, %s189
        $region32: #{tpu_custom_call.1} parent=23 // pred_fallthru
          _
      $region24: #{tpu_custom_call.1} parent=5 // pred_fallthru
        _
      %p207 = scmp.le.s32.totalorder 2, %s18
      // Predicated region
      $region33: #{tpu_custom_call.1} parent=5 // pred_check
        %p208 = pneg %p207
      $region34: #{tpu_custom_call.1} parent=5 // pred_check_branch
        %210 = sbr.rel (%p208) target = $region36
      $region35: #{tpu_custom_call.1} parent=5 // pred_region
        %s211 = ssub.s32 %s18, 2
        // Predicated region
        $region37: #{tpu_custom_call.1} parent=35 // pred_check
          %p212 = pneg %p73
        $region38: #{tpu_custom_call.1} parent=35 // pred_check_branch
          %214 = sbr.rel (%p212) target = $region40
        $region39: #{tpu_custom_call.1} parent=35 // pred_region
          %s215 = sand.u32 %s58, 1
          %s216 = scalar_lea.sflag [#allocation6], %s215
          %s217 = sand.u32 %s58, 1
          %s218 = smul.addr %s217, 32
          %s219 = scalar_lea.vmem [#allocation7], %s218
          %220 = dma.done %s216, 512
        $region40: #{tpu_custom_call.1} parent=35 // pred_fallthru
          _
      $region36: #{tpu_custom_call.1} parent=5 // pred_fallthru
        _
    $region6: #{tpu_custom_call.1} parent=1 // loop_footer
      %s22 = sadd.s32 1, %s18
    $region7: #{tpu_custom_call.1} parent=1 // loop_footer_branch
      %17 = sbr.rel target = $region3
    $region8: #{tpu_custom_call.1} parent=1 // loop_exit
      _
    %221 = vsyncpa [#allocation5], 1
    %s222 = scalar_lea.sflag [#allocation5], 1
    %223 = vsyncpa %s222, 1
    %224 = vsyncpa [#allocation6], 1
    %s225 = scalar_lea.sflag [#allocation6], 1
    %226 = vsyncpa %s225, 1

</llo_original>
